<compile_context>
chip_gen: v7x
topology: tpu7x:2x2x1
jax: 0.10.0
libtpu: 0.0.40
codegen_flags: <defaults>
</compile_context>

<pallas_src>
import jax
import jax.numpy as jnp
from jax import lax
from jax.experimental import pallas as pl
from jax.experimental.pallas import tpu as pltpu

_BISECT_ITERS = 32  # interval width 1.0 -> 2^-32; far below any float32 gap that matters


def _attention_kernel(q_ref, k_ref, v_ref, ctx_ref, w_ref):
    # Native-dtype operands straight to the MXU (no f32 pre-cast of q/k/v).
    q = q_ref[0]          # [tq, D]
    k = k_ref[0]          # [Lk, D]
    v = v_ref[0]          # [Lk, Dv]

    # attention_logits = q @ k^T, contraction via dimension_numbers (no k.T).
    z = lax.dot_general(q, k, (((1,), (1,)), ((), ())),
                        preferred_element_type=jnp.float32)       # [tq, Lk] f32

    # ---- sparsemax threshold via bisection; everything stays [tq, Lk] ----
    row_max = jnp.max(z, axis=-1, keepdims=True)                  # [tq, 1]
    lo0 = row_max - 1.0                                           # f(lo0) >= 1
    hi0 = row_max                                                 # f(hi0) == 0

    def body(_, carry):
        lo, hi = carry
        mid = 0.5 * (lo + hi)
        s = jnp.sum(jnp.maximum(z - mid, 0.0), axis=-1, keepdims=True)
        go_right = s > 1.0                                        # root lies above mid
        lo = jnp.where(go_right, mid, lo)
        hi = jnp.where(go_right, hi, mid)
        return lo, hi

    _, hi = lax.fori_loop(0, _BISECT_ITERS, body, (lo0, hi0))
    tau_std = hi                      # >= exact tau*, within ~2^-32

    # Support of the *standard* sparsemax: rho = #{z_j > tau*}, S_rho = their sum.
    support = z > tau_std
    rho = jnp.maximum(
        jnp.sum(support.astype(jnp.float32), axis=-1, keepdims=True), 1.0)   # [tq, 1]
    s_rho = jnp.sum(jnp.where(support, z, 0.0), axis=-1, keepdims=True)      # [tq, 1]

    # The module's quirky threshold subtracts 1 twice: tau = (S_rho - 2) / rho.
    tau = (s_rho - 2.0) / rho                                     # [tq, 1] divide only
    w = jnp.maximum(z - tau, 0.0)                                 # [tq, Lk], w >= 0

    # F.normalize(p=1, dim=2); w >= 0 so abs is unnecessary.
    l1 = jnp.sum(w, axis=-1, keepdims=True)                       # [tq, 1]
    w_n = w * (1.0 / jnp.maximum(l1, 1e-12))                      # divide on [tq, 1]

    # context = attention_weights @ value (weights cast to value dtype for the MXU).
    ctx = jnp.dot(w_n.astype(v.dtype), v, preferred_element_type=jnp.float32)

    ctx_ref[0] = ctx.astype(ctx_ref.dtype)
    w_ref[0] = w_n.astype(w_ref.dtype)


def _pick_tq(lq):
    # Largest power-of-two divisor of Lq, capped at 256: keeps the [tq, Lk]
    # tiles comfortably inside VMEM even on v7x (64 MiB) and gives the grid
    # enough steps to pipeline / shard across both v7x TensorCores.
    for cand in (256, 128, 64, 32, 16, 8, 4, 2, 1):
        if cand <= lq and lq % cand == 0:
            return cand
    return 1


def attention(query, key, value):
    B, Lq, D = query.shape
    _, Lk, _ = key.shape
    _, _, Dv = value.shape
    tq = _pick_tq(Lq)
    out_dtype = query.dtype
    return pl.pallas_call(
        _attention_kernel,
        out_shape=(jax.ShapeDtypeStruct((B, Lq, Dv), out_dtype),
                   jax.ShapeDtypeStruct((B, Lq, Lk), out_dtype)),
        grid_spec=pltpu.PrefetchScalarGridSpec(
            num_scalar_prefetch=0,
            grid=(B, Lq // tq),
            in_specs=[pl.BlockSpec((1, tq, D), lambda b, i: (b, i, 0)),
                      pl.BlockSpec((1, Lk, D), lambda b, i: (b, 0, 0)),
                      pl.BlockSpec((1, Lk, Dv), lambda b, i: (b, 0, 0))],
            out_specs=[pl.BlockSpec((1, tq, Dv), lambda b, i: (b, i, 0)),
                       pl.BlockSpec((1, tq, Lk), lambda b, i: (b, i, 0))]),
        compiler_params=pltpu.CompilerParams(
            dimension_semantics=("parallel", "parallel")),
    )(query, key, value)


# ---------------- pure-JAX reference (mirrors the PyTorch code) ----------------
def _sparsemax_ref(x):
    K = x.shape[-1]
    s = -jnp.sort(-x, axis=-1)                       # descending sort
    cum = jnp.cumsum(s, axis=-1) - 1.0
    rng = jnp.arange(1, K + 1, dtype=jnp.float32).reshape(1, 1, K)
    valid = (s - cum / rng) > 0
    rho = jnp.sum(valid, axis=-1, keepdims=True)
    tau = (jnp.take_along_axis(cum, rho - 1, axis=-1) - 1.0) / rho.astype(jnp.float32)
    return jnp.maximum(jnp.zeros_like(x), x - tau)


def _attention_ref(q, k, v):
    z = jnp.einsum('bqd,bkd->bqk', q, k)
    w = _sparsemax_ref(z)
    l1 = jnp.sum(jnp.abs(w), axis=-1, keepdims=True)
    w = w / jnp.maximum(l1, 1e-12)
    ctx = jnp.einsum('bqk,bkv->bqv', w, v)
    return ctx, w


if __name__ == "__main__":
    # The Attention module has no learnable parameters; only inputs are needed.
    B, Lq, Lk, D, Dv = 2, 8, 8, 16, 16
    root = jax.random.PRNGKey(0)
    kq, kk, kv = jax.random.split(root, 3)
    query = jax.random.normal(kq, (B, Lq, D), dtype=jnp.float32)
    key_ = jax.random.normal(kk, (B, Lk, D), dtype=jnp.float32)
    value = jax.random.normal(kv, (B, Lk, Dv), dtype=jnp.float32)

    ctx, w = attention(query, key_, value)
    jax.block_until_ready((ctx, w))

    ctx_ref, w_ref = _attention_ref(query, key_, value)
    assert ctx.shape == (B, Lq, Dv) and w.shape == (B, Lq, Lk)
    assert jnp.allclose(w, w_ref, rtol=1e-3, atol=1e-3), \
        float(jnp.max(jnp.abs(w - w_ref)))
    assert jnp.allclose(ctx, ctx_ref, rtol=1e-3, atol=1e-3), \
        float(jnp.max(jnp.abs(ctx - ctx_ref)))

    print("KERNEL_OK")
</pallas_src>

<mosaic_0001>
module attributes {stable_mosaic.version = 11 : i64} {
  func.func @_attention_kernel(%arg0: i32, %arg1: i32, %arg2: memref<1x8x16xf32, #tpu.memory_space<vmem>>, %arg3: memref<1x8x16xf32, #tpu.memory_space<vmem>>, %arg4: memref<1x8x16xf32, #tpu.memory_space<vmem>>, %arg5: memref<1x8x16xf32, #tpu.memory_space<vmem>>, %arg6: memref<1x8x8xf32, #tpu.memory_space<vmem>>) attributes {dimension_semantics = [#tpu.dimension_semantics<parallel>, #tpu.dimension_semantics<parallel>], iteration_bounds = array<i64: 2, 1>, scalar_prefetch = 0 : i64, scratch_operands = 0 : i64, tpu.core_type = #tpu.core_type<tc>, window_params = [{transform_indices = @transform_0, window_bounds = array<i64: 1, 8, 16>}, {transform_indices = @transform_1, window_bounds = array<i64: 1, 8, 16>}, {transform_indices = @transform_2, window_bounds = array<i64: 1, 8, 16>}, {transform_indices = @transform_3, window_bounds = array<i64: 1, 8, 16>}, {transform_indices = @transform_4, window_bounds = array<i64: 1, 8, 8>}]} {
    %c0 = arith.constant 0 : index
    %c0_0 = arith.constant 0 : index
    %c0_1 = arith.constant 0 : index
    %0 = vector.load %arg2[%c0, %c0_0, %c0_1] : memref<1x8x16xf32, #tpu.memory_space<vmem>>, vector<1x8x16xf32>
    %1 = vector.shape_cast %0 : vector<1x8x16xf32> to vector<8x16xf32>
    %c0_2 = arith.constant 0 : index
    %c0_3 = arith.constant 0 : index
    %c0_4 = arith.constant 0 : index
    %2 = vector.load %arg3[%c0_2, %c0_3, %c0_4] : memref<1x8x16xf32, #tpu.memory_space<vmem>>, vector<1x8x16xf32>
    %3 = vector.shape_cast %2 : vector<1x8x16xf32> to vector<8x16xf32>
    %c0_5 = arith.constant 0 : index
    %c0_6 = arith.constant 0 : index
    %c0_7 = arith.constant 0 : index
    %4 = vector.load %arg4[%c0_5, %c0_6, %c0_7] : memref<1x8x16xf32, #tpu.memory_space<vmem>>, vector<1x8x16xf32>
    %5 = vector.shape_cast %4 : vector<1x8x16xf32> to vector<8x16xf32>
    %cst = arith.constant dense<0.000000e+00> : vector<8x8xf32>
    %6 = tpu.matmul %1, %3, %cst {dimension_numbers = #tpu.dot_dimension_numbers<[1], [1], [0], [0], [0, 0, 1, 0], [], []>} : vector<8x16xf32>, vector<8x16xf32>, vector<8x8xf32> -> vector<8x8xf32>
    %cst_8 = arith.constant dense<0xFF800000> : vector<8xf32>
    %7 = vector.multi_reduction <maximumf>, %6, %cst_8 [1] : vector<8x8xf32> to vector<8xf32>
    %8 = vector.shape_cast %7 : vector<8xf32> to vector<8x1xf32>
    %cst_9 = arith.constant 1.000000e+00 : f32
    %9 = vector.broadcast %cst_9 : f32 to vector<8x1xf32>
    %10 = arith.subf %8, %9 : vector<8x1xf32>
    %c0_i32 = arith.constant 0 : i32
    %c32_i32 = arith.constant 32 : i32
    %11 = arith.addi %c0_i32, %c32_i32 : i32
    %c1_i32 = arith.constant 1 : i32
    %12:2 = scf.for %arg7 = %c0_i32 to %11 step %c1_i32 iter_args(%arg8 = %10, %arg9 = %8) -> (vector<8x1xf32>, vector<8x1xf32>)  : i32 {
      %47 = arith.addf %arg8, %arg9 : vector<8x1xf32>
      %cst_26 = arith.constant 5.000000e-01 : f32
      %48 = vector.broadcast %cst_26 : f32 to vector<8x1xf32>
      %49 = arith.mulf %48, %47 : vector<8x1xf32>
      %50 = vector.broadcast %49 : vector<8x1xf32> to vector<8x8xf32>
      %51 = arith.subf %6, %50 : vector<8x8xf32>
      %cst_27 = arith.constant 0.000000e+00 : f32
      %52 = vector.broadcast %cst_27 : f32 to vector<8x8xf32>
      %53 = arith.maximumf %51, %52 : vector<8x8xf32>
      %cst_28 = arith.constant dense<0.000000e+00> : vector<8xf32>
      %54 = vector.multi_reduction <add>, %53, %cst_28 [1] : vector<8x8xf32> to vector<8xf32>
      %55 = vector.shape_cast %54 : vector<8xf32> to vector<8x1xf32>
      %cst_29 = arith.constant 1.000000e+00 : f32
      %56 = vector.broadcast %cst_29 : f32 to vector<8x1xf32>
      %57 = arith.cmpf ogt, %55, %56 : vector<8x1xf32>
      %58 = arith.select %57, %49, %arg8 : vector<8x1xi1>, vector<8x1xf32>
      %59 = arith.select %57, %arg9, %49 : vector<8x1xi1>, vector<8x1xf32>
      scf.yield %58, %59 : vector<8x1xf32>, vector<8x1xf32>
    }
    %13 = vector.broadcast %12#1 : vector<8x1xf32> to vector<8x8xf32>
    %14 = arith.cmpf ogt, %6, %13 : vector<8x8xf32>
    %15 = arith.extui %14 : vector<8x8xi1> to vector<8x8xi32>
    %16 = arith.sitofp %15 : vector<8x8xi32> to vector<8x8xf32>
    %cst_10 = arith.constant dense<0.000000e+00> : vector<8xf32>
    %17 = vector.multi_reduction <add>, %16, %cst_10 [1] : vector<8x8xf32> to vector<8xf32>
    %18 = vector.shape_cast %17 : vector<8xf32> to vector<8x1xf32>
    %cst_11 = arith.constant 1.000000e+00 : f32
    %19 = vector.broadcast %cst_11 : f32 to vector<8x1xf32>
    %20 = arith.maximumf %18, %19 : vector<8x1xf32>
    %cst_12 = arith.constant 0.000000e+00 : f32
    %21 = vector.broadcast %cst_12 : f32 to vector<8x8xf32>
    %22 = arith.select %14, %6, %21 : vector<8x8xi1>, vector<8x8xf32>
    %cst_13 = arith.constant dense<0.000000e+00> : vector<8xf32>
    %23 = vector.multi_reduction <add>, %22, %cst_13 [1] : vector<8x8xf32> to vector<8xf32>
    %24 = vector.shape_cast %23 : vector<8xf32> to vector<8x1xf32>
    %cst_14 = arith.constant 2.000000e+00 : f32
    %25 = vector.broadcast %cst_14 : f32 to vector<8x1xf32>
    %26 = arith.subf %24, %25 : vector<8x1xf32>
    %27 = arith.divf %26, %20 : vector<8x1xf32>
    %28 = vector.broadcast %27 : vector<8x1xf32> to vector<8x8xf32>
    %29 = arith.subf %6, %28 : vector<8x8xf32>
    %cst_15 = arith.constant 0.000000e+00 : f32
    %30 = vector.broadcast %cst_15 : f32 to vector<8x8xf32>
    %31 = arith.maximumf %29, %30 : vector<8x8xf32>
    %cst_16 = arith.constant dense<0.000000e+00> : vector<8xf32>
    %32 = vector.multi_reduction <add>, %31, %cst_16 [1] : vector<8x8xf32> to vector<8xf32>
    %33 = vector.shape_cast %32 : vector<8xf32> to vector<8x1xf32>
    %cst_17 = arith.constant 9.99999996E-13 : f32
    %34 = vector.broadcast %cst_17 : f32 to vector<8x1xf32>
    %35 = arith.maximumf %33, %34 : vector<8x1xf32>
    %cst_18 = arith.constant 1.000000e+00 : f32
    %36 = vector.broadcast %cst_18 : f32 to vector<8x1xf32>
    %37 = arith.divf %36, %35 : vector<8x1xf32>
    %38 = vector.broadcast %37 : vector<8x1xf32> to vector<8x8xf32>
    %39 = arith.mulf %31, %38 : vector<8x8xf32>
    %cst_19 = arith.constant dense<0.000000e+00> : vector<8x16xf32>
    %40 = tpu.matmul %39, %5, %cst_19 {dimension_numbers = #tpu.dot_dimension_numbers<[1], [0], [0], [1], [0, 0, 1, 1], [], []>} : vector<8x8xf32>, vector<8x16xf32>, vector<8x16xf32> -> vector<8x16xf32>
    %c0_20 = arith.constant 0 : index
    %c0_21 = arith.constant 0 : index
    %c0_22 = arith.constant 0 : index
    %41 = vector.load %arg5[%c0_20, %c0_21, %c0_22] : memref<1x8x16xf32, #tpu.memory_space<vmem>>, vector<1x8x16xf32>
    %42 = vector.shape_cast %41 : vector<1x8x16xf32> to vector<8x16xf32>
    %43 = vector.shape_cast %40 : vector<8x16xf32> to vector<1x8x16xf32>
    tpu.vector_store %arg5[%c0_20, %c0_21, %c0_22], %43 {strides = array<i32>} : memref<1x8x16xf32, #tpu.memory_space<vmem>>, vector<1x8x16xf32>,
    %c0_23 = arith.constant 0 : index
    %c0_24 = arith.constant 0 : index
    %c0_25 = arith.constant 0 : index
    %44 = vector.load %arg6[%c0_23, %c0_24, %c0_25] : memref<1x8x8xf32, #tpu.memory_space<vmem>>, vector<1x8x8xf32>
    %45 = vector.shape_cast %44 : vector<1x8x8xf32> to vector<8x8xf32>
    %46 = vector.shape_cast %39 : vector<8x8xf32> to vector<1x8x8xf32>
    tpu.vector_store %arg6[%c0_23, %c0_24, %c0_25], %46 {strides = array<i32>} : memref<1x8x8xf32, #tpu.memory_space<vmem>>, vector<1x8x8xf32>,
    return
  }
  func.func @transform_0(%arg0: i32, %arg1: i32) -> (i32, i32, i32) {
    %c0_i32 = arith.constant 0 : i32
    %c0_i32_0 = arith.constant 0 : i32
    return %arg0, %arg1, %c0_i32 : i32, i32, i32
  }
  func.func @transform_1(%arg0: i32, %arg1: i32) -> (i32, i32, i32) {
    %c0_i32 = arith.constant 0 : i32
    %c0_i32_0 = arith.constant 0 : i32
    %c0_i32_1 = arith.constant 0 : i32
    return %arg0, %c0_i32, %c0_i32_0 : i32, i32, i32
  }
  func.func @transform_2(%arg0: i32, %arg1: i32) -> (i32, i32, i32) {
    %c0_i32 = arith.constant 0 : i32
    %c0_i32_0 = arith.constant 0 : i32
    %c0_i32_1 = arith.constant 0 : i32
    return %arg0, %c0_i32, %c0_i32_0 : i32, i32, i32
  }
  func.func @transform_3(%arg0: i32, %arg1: i32) -> (i32, i32, i32) {
    %c0_i32 = arith.constant 0 : i32
    %c0_i32_0 = arith.constant 0 : i32
    return %arg0, %arg1, %c0_i32 : i32, i32, i32
  }
  func.func @transform_4(%arg0: i32, %arg1: i32) -> (i32, i32, i32) {
    %c0_i32 = arith.constant 0 : i32
    %c0_i32_0 = arith.constant 0 : i32
    return %arg0, %arg1, %c0_i32 : i32, i32, i32
  }
}

</mosaic_0001>

<llo_original>
// kernel: tpu_custom_call.1
$region0: #{tpu_custom_call.1}
  #allocation0 [shape = 'u32[]', space=smem, size = 0x4, offset = 0x4, fixed_abs, tag = 'smem constant byte address 0x4 - core index']
  #allocation1 [shape = 'u32[144,128]{1,0:T(1,128)}', space=vmem, size = 0x12000, scoped, tag = 'internal scratch']
  %s0 = inlined_call_operand.hbm [shape: f32[2,8,16], index: 0, kind: input, shape index: {}]
  %s1 = inlined_call_operand.hbm [shape: f32[2,8,16], index: 1, kind: input, shape index: {}]
  %s2 = inlined_call_operand.hbm [shape: f32[2,8,16], index: 2, kind: input, shape index: {}]
  %s3 = inlined_call_operand.hbm [shape: f32[2,8,16], index: 3, kind: output, shape index: {0}]
  %s4 = inlined_call_operand.hbm [shape: f32[2,8,8], index: 4, kind: output, shape index: {1}]
  %5 = xla_tuple %s3, %s4
  %s6 = sld [smem:[#allocation0]]
  $region72: #{tpu_custom_call.1} parent=0
    _
  %s8 = ssub.s32 1, %s6
  %s9 = scalar_select 0, %s8, %s6
  $region1: #{tpu_custom_call.1} parent=0
    #allocation2 [shape = 'u8[8192]{0}', space=vmem, size = 0x2000, scoped, tag = 'input window, operand 0']
    #allocation3 [shape = 's32[2]{0}', space=sflag, size = 0x8, scoped, tag = 'scoped memory for tpu_custom_call.1']
    #allocation4 [shape = 's32[2]{0}', space=sflag, size = 0x8, scoped, tag = 'scoped memory for tpu_custom_call.1']
    #allocation5 [shape = 'u8[8192]{0}', space=vmem, size = 0x2000, scoped, tag = 'input window, operand 1']
    #allocation6 [shape = 's32[2]{0}', space=sflag, size = 0x8, scoped, tag = 'scoped memory for tpu_custom_call.1']
    #allocation7 [shape = 'u8[8192]{0}', space=vmem, size = 0x2000, scoped, tag = 'input window, operand 2']
    #allocation8 [shape = 'u8[8192]{0}', space=vmem, size = 0x2000, scoped, tag = 'output window, operand 0']
    #allocation9 [shape = 'u8[8192]{0}', space=vmem, size = 0x2000, scoped, tag = 'output window, operand 1']
    #allocation10 [shape = 's32[2]{0}', space=sflag, size = 0x8, scoped, tag = 'scoped memory for tpu_custom_call.1']
    %10 = vsyncpa [#allocation3], 0
    %s11 = scalar_lea.sflag [#allocation3], 1
    %12 = vsyncpa %s11, 0
    %13 = vsyncpa [#allocation6], 0
    %s14 = scalar_lea.sflag [#allocation6], 1
    %15 = vsyncpa %s14, 0
    %16 = vsyncpa [#allocation4], 0
    %s17 = scalar_lea.sflag [#allocation4], 1
    %18 = vsyncpa %s17, 0
    %19 = vsyncpa [#allocation10], 0
    %s20 = scalar_lea.sflag [#allocation10], 1
    %21 = vsyncpa %s20, 0
    loop: start=0, step=1, limit=4
    $region2: #{tpu_custom_call.1} parent=1 // loop_pre_header
      _
    $region3: #{tpu_custom_call.1} parent=1 // loop_header
      %s23 = sphi 0, %s27
      %p24 = scmp.ge.s32.totalorder %s23, 4
      %s30 = sphi 0, %s42
      %s31 = sphi 0, %s38
      %s32 = sphi 0, %s30
      %s33 = sphi 0, %s31
      %s34 = sphi 0, %s32
      %s35 = sphi 0, %s33
      %s47 = sphi 0, %s49
      %s50 = sphi 0, %s47
      %s51 = sphi 0, %s50
      %s67 = sphi 0, %s51
      %s73 = sphi 0, %s75
      %s76 = sphi 0, %s73
      %s77 = sphi 0, %s76
      %s93 = sphi 0, %s77
      %s99 = sphi 0, %s101
      %s102 = sphi 0, %s99
      %s103 = sphi 0, %s102
      %s119 = sphi 0, %s103
      %s127 = sphi 0, %s129
      %s130 = sphi 0, %s127
      %s131 = sphi 0, %s130
      %s147 = sphi 0, %s131
      %s155 = sphi 0, %s157
      %s158 = sphi 0, %s155
      %s159 = sphi 0, %s158
      %s175 = sphi 0, %s159
    $region4: #{tpu_custom_call.1} parent=1 // loop_header_branch
      %26 = sbr.rel (%p24) target = $region8
    $region5: #{tpu_custom_call.1} parent=1 // loop_body
      %s28 = ssub.s32 %s23, 1
      %s29 = ssub.s32 %s23, 2
      %s36 = sadd.s32 1, %s31
      %p37 = scmp.ge.s32.totalorder %s36, 1
      %s38 = scalar_select %p37, 0, %s36
      %s39 = sadd.s32 1, %s30
      %s40 = scalar_select %p37, %s39, %s30
      %p41 = scmp.ge.s32.totalorder %s40, 2
      %s42 = scalar_select %p41, 0, %s40
      %s43 = ssub.s32 %s30, %s42
      %s44 = ssub.s32 %s31, %s38
      %s45 = sor.u32 %s43, %s44
      %p46 = scmp.eq.s32.totalorder %s45, 0
      %s48 = sadd.s32 %s47, 1
      %s49 = scalar_select %p46, %s47, %s48
      %p52 = pneg %p46
      %p53 = scmp.eq.s32.totalorder %s23, 1
      %p54 = por %p52, %p53
      %p55 = scmp.ne.s32.totalorder %s47, %s50
      %p56 = scmp.eq.s32.totalorder %s23, 0
      %p57 = por %p55, %p56
      %p58 = scmp.ne.s32.totalorder %s47, %s50
      %p59 = scmp.eq.s32.totalorder %s28, 1
      %p60 = por %p58, %p59
      %p61 = scmp.ne.s32.totalorder %s50, %s51
      %p62 = scmp.eq.s32.totalorder %s28, 0
      %p63 = por %p61, %p62
      %p64 = scmp.ne.s32.totalorder %s50, %s51
      %p65 = scmp.eq.s32.totalorder %s29, 1
      %p66 = por %p64, %p65
      %p68 = scmp.ne.s32.totalorder %s51, %s67
      %p69 = scmp.eq.s32.totalorder %s29, 0
      %p70 = por %p68, %p69
      %s71 = ssub.s32 %s30, %s42
      %p72 = scmp.eq.s32.totalorder %s71, 0
      %s74 = sadd.s32 %s73, 1
      %s75 = scalar_select %p72, %s73, %s74
      %p78 = pneg %p72
      %p79 = scmp.eq.s32.totalorder %s23, 1
      %p80 = por %p78, %p79
      %p81 = scmp.ne.s32.totalorder %s73, %s76
      %p82 = scmp.eq.s32.totalorder %s23, 0
      %p83 = por %p81, %p82
      %p84 = scmp.ne.s32.totalorder %s73, %s76
      %p85 = scmp.eq.s32.totalorder %s28, 1
      %p86 = por %p84, %p85
      %p87 = scmp.ne.s32.totalorder %s76, %s77
      %p88 = scmp.eq.s32.totalorder %s28, 0
      %p89 = por %p87, %p88
      %p90 = scmp.ne.s32.totalorder %s76, %s77
      %p91 = scmp.eq.s32.totalorder %s29, 1
      %p92 = por %p90, %p91
      %p94 = scmp.ne.s32.totalorder %s77, %s93
      %p95 = scmp.eq.s32.totalorder %s29, 0
      %p96 = por %p94, %p95
      %s97 = ssub.s32 %s30, %s42
      %p98 = scmp.eq.s32.totalorder %s97, 0
      %s100 = sadd.s32 %s99, 1
      %s101 = scalar_select %p98, %s99, %s100
      %p104 = pneg %p98
      %p105 = scmp.eq.s32.totalorder %s23, 1
      %p106 = por %p104, %p105
      %p107 = scmp.ne.s32.totalorder %s99, %s102
      %p108 = scmp.eq.s32.totalorder %s23, 0
      %p109 = por %p107, %p108
      %p110 = scmp.ne.s32.totalorder %s99, %s102
      %p111 = scmp.eq.s32.totalorder %s28, 1
      %p112 = por %p110, %p111
      %p113 = scmp.ne.s32.totalorder %s102, %s103
      %p114 = scmp.eq.s32.totalorder %s28, 0
      %p115 = por %p113, %p114
      %p116 = scmp.ne.s32.totalorder %s102, %s103
      %p117 = scmp.eq.s32.totalorder %s29, 1
      %p118 = por %p116, %p117
      %p120 = scmp.ne.s32.totalorder %s103, %s119
      %p121 = scmp.eq.s32.totalorder %s29, 0
      %p122 = por %p120, %p121
      %s123 = ssub.s32 %s30, %s42
      %s124 = ssub.s32 %s31, %s38
      %s125 = sor.u32 %s123, %s124
      %p126 = scmp.eq.s32.totalorder %s125, 0
      %s128 = sadd.s32 %s127, 1
      %s129 = scalar_select %p126, %s127, %s128
      %p132 = pneg %p126
      %p133 = scmp.eq.s32.totalorder %s23, 1
      %p134 = por %p132, %p133
      %p135 = scmp.ne.s32.totalorder %s127, %s130
      %p136 = scmp.eq.s32.totalorder %s23, 0
      %p137 = por %p135, %p136
      %p138 = scmp.ne.s32.totalorder %s127, %s130
      %p139 = scmp.eq.s32.totalorder %s28, 1
      %p140 = por %p138, %p139
      %p141 = scmp.ne.s32.totalorder %s130, %s131
      %p142 = scmp.eq.s32.totalorder %s28, 0
      %p143 = por %p141, %p142
      %p144 = scmp.ne.s32.totalorder %s130, %s131
      %p145 = scmp.eq.s32.totalorder %s29, 1
      %p146 = por %p144, %p145
      %p148 = scmp.ne.s32.totalorder %s131, %s147
      %p149 = scmp.eq.s32.totalorder %s29, 0
      %p150 = por %p148, %p149
      %s151 = ssub.s32 %s30, %s42
      %s152 = ssub.s32 %s31, %s38
      %s153 = sor.u32 %s151, %s152
      %p154 = scmp.eq.s32.totalorder %s153, 0
      %s156 = sadd.s32 %s155, 1
      %s157 = scalar_select %p154, %s155, %s156
      %p160 = pneg %p154
      %p161 = scmp.eq.s32.totalorder %s23, 1
      %p162 = por %p160, %p161
      %p163 = scmp.ne.s32.totalorder %s155, %s158
      %p164 = scmp.eq.s32.totalorder %s23, 0
      %p165 = por %p163, %p164
      %p166 = scmp.ne.s32.totalorder %s155, %s158
      %p167 = scmp.eq.s32.totalorder %s28, 1
      %p168 = por %p166, %p167
      %p169 = scmp.ne.s32.totalorder %s158, %s159
      %p170 = scmp.eq.s32.totalorder %s28, 0
      %p171 = por %p169, %p170
      %p172 = scmp.ne.s32.totalorder %s158, %s159
      %p173 = scmp.eq.s32.totalorder %s29, 1
      %p174 = por %p172, %p173
      %p176 = scmp.ne.s32.totalorder %s159, %s175
      %p177 = scmp.eq.s32.totalorder %s29, 0
      %p178 = por %p176, %p177
      %p179 = scmp.le.s32.totalorder 1, %s23
      %p180 = scmp.lt.s32.totalorder %s23, 3
      %p181 = pnand %p179, %p180
      %p182 = pneg %p181
      // Predicated region
      $region9: #{tpu_custom_call.1} parent=5 // pred_check
        _
      $region10: #{tpu_custom_call.1} parent=5 // pred_check_branch
        %184 = sbr.rel (%p181) target = $region12
      $region11: #{tpu_custom_call.1} parent=5 // pred_region
        %s185 = ssub.s32 %s23, 1
      $region12: #{tpu_custom_call.1} parent=5 // pred_fallthru
        _
      %p186 = scmp.lt.s32.totalorder %s23, 2
      // Predicated region
      $region13: #{tpu_custom_call.1} parent=5 // pred_check
        %p187 = pneg %p186
      $region14: #{tpu_custom_call.1} parent=5 // pred_check_branch
        %189 = sbr.rel (%p187) target = $region16
      $region15: #{tpu_custom_call.1} parent=5 // pred_region
        // Predicated region
        $region17: #{tpu_custom_call.1} parent=15 // pred_check
          %p190 = pneg %p57
        $region18: #{tpu_custom_call.1} parent=15 // pred_check_branch
          %192 = sbr.rel (%p190) target = $region20
        $region19: #{tpu_custom_call.1} parent=15 // pred_region
          %s193 = sand.u32 %s47, 1
          %s194 = scalar_lea.sflag [#allocation3], %s193
          %s195 = sand.u32 %s47, 1
          %s196 = smul.addr %s195, 8
          %s197 = scalar_lea.vmem [#allocation2], %s196
          %s199 = ssub.s32 128, 128
          %200 = vsyncadd %s194, %s199
          %s201 = sadd.s32 %s31, %s30
          %s202 = smul.addr %s201, 128
          %s203 = scalar_lea.hbm %s0, %s202
          %s205 = sshll.u32 %s197, 4
          %s206 = int_to_ptr.vmem [resolvable:$true] %s205
          %208 = dma.hbm_to_vmem [thread:$0]  %s203, 128, %s206, %s194
        $region20: #{tpu_custom_call.1} parent=15 // pred_fallthru
          _
        // Predicated region
        $region21: #{tpu_custom_call.1} parent=15 // pred_check
          %p209 = pneg %p83
        $region22: #{tpu_custom_call.1} parent=15 // pred_check_branch
          %211 = sbr.rel (%p209) target = $region24
        $region23: #{tpu_custom_call.1} parent=15 // pred_region
          %s212 = sand.u32 %s23, 1
          %s213 = scalar_lea.sflag [#allocation6], %s212
          %s214 = sand.u32 %s73, 1
          %s215 = smul.addr %s214, 8
          %s216 = scalar_lea.vmem [#allocation5], %s215
          %s218 = ssub.s32 128, 128
          %219 = vsyncadd %s213, %s218
          %s220 = smul.addr %s30, 128
          %s221 = scalar_lea.hbm %s1, %s220
          %s223 = sshll.u32 %s216, 4
          %s224 = int_to_ptr.vmem [resolvable:$true] %s223
          %226 = dma.hbm_to_vmem [thread:$0]  %s221, 128, %s224, %s213
        $region24: #{tpu_custom_call.1} parent=15 // pred_fallthru
          _
        // Predicated region
        $region25: #{tpu_custom_call.1} parent=15 // pred_check
          %p227 = pneg %p109
        $region26: #{tpu_custom_call.1} parent=15 // pred_check_branch
          %229 = sbr.rel (%p227) target = $region28
        $region27: #{tpu_custom_call.1} parent=15 // pred_region
          %s230 = sand.u32 %s23, 1
          %s231 = scalar_lea.sflag [#allocation6], %s230
          %s232 = sand.u32 %s99, 1
          %s233 = smul.addr %s232, 8
          %s234 = scalar_lea.vmem [#allocation7], %s233
          %s236 = ssub.s32 128, 128
          %237 = vsyncadd %s231, %s236
          %s238 = smul.addr %s30, 128
          %s239 = scalar_lea.hbm %s2, %s238
          %s241 = sshll.u32 %s234, 4
          %s242 = int_to_ptr.vmem [resolvable:$true] %s241
          %244 = dma.hbm_to_vmem [thread:$0]  %s239, 128, %s242, %s231
        $region28: #{tpu_custom_call.1} parent=15 // pred_fallthru
          _
      $region16: #{tpu_custom_call.1} parent=5 // pred_fallthru
        _
      %p245 = scmp.le.s32.totalorder 1, %s23
      %p246 = scmp.lt.s32.totalorder %s23, 3
      %p247 = pnand %p245, %p246
      %p248 = pneg %p247
      // Predicated region
      $region29: #{tpu_custom_call.1} parent=5 // pred_check
        _
      $region30: #{tpu_custom_call.1} parent=5 // pred_check_branch
        %250 = sbr.rel (%p247) target = $region32
      $region31: #{tpu_custom_call.1} parent=5 // pred_region
        %s251 = ssub.s32 %s23, 1
        %s252 = sand.u32 %s50, 1
        %s253 = scalar_lea.sflag [#allocation3], %s252
        %s254 = sand.u32 %s50, 1
        %s255 = smul.addr %s254, 8
        %s256 = scalar_lea.vmem [#allocation2], %s255
        // Predicated region
        $region33: #{tpu_custom_call.1} parent=31 // pred_check
          %p257 = pneg %p63
        $region34: #{tpu_custom_call.1} parent=31 // pred_check_branch
          %259 = sbr.rel (%p257) target = $region36
        $region35: #{tpu_custom_call.1} parent=31 // pred_region
          %260 = dma.done %s253, 128
        $region36: #{tpu_custom_call.1} parent=31 // pred_fallthru
          _
        %s261 = sand.u32 %s28, 1
        %s262 = scalar_lea.sflag [#allocation6], %s261
        %s263 = sand.u32 %s76, 1
        %s264 = smul.addr %s263, 8
        %s265 = scalar_lea.vmem [#allocation5], %s264
        // Predicated region
        $region37: #{tpu_custom_call.1} parent=31 // pred_check
          %p266 = pneg %p89
        $region38: #{tpu_custom_call.1} parent=31 // pred_check_branch
          %268 = sbr.rel (%p266) target = $region40
        $region39: #{tpu_custom_call.1} parent=31 // pred_region
          %269 = dma.done %s262, 128
        $region40: #{tpu_custom_call.1} parent=31 // pred_fallthru
          _
        %s270 = sand.u32 %s28, 1
        %s271 = scalar_lea.sflag [#allocation6], %s270
        %s272 = sand.u32 %s102, 1
        %s273 = smul.addr %s272, 8
        %s274 = scalar_lea.vmem [#allocation7], %s273
        // Predicated region
        $region41: #{tpu_custom_call.1} parent=31 // pred_check
          %p275 = pneg %p115
        $region42: #{tpu_custom_call.1} parent=31 // pred_check_branch
          %277 = sbr.rel (%p275) target = $region44
        $region43: #{tpu_custom_call.1} parent=31 // pred_region
          %278 = dma.done %s271, 128
        $region44: #{tpu_custom_call.1} parent=31 // pred_fallthru
          _
        %s279 = sand.u32 %s50, 1
        %s280 = scalar_lea.sflag [#allocation3], %s279
        %s281 = sand.u32 %s50, 1
        %s282 = smul.addr %s281, 8
        %s283 = scalar_lea.vmem [#allocation2], %s282
        %p284 = pneg %p63
        %p285 = pneg %p60
        %s286 = sand.u32 %s28, 1
        %s287 = scalar_lea.sflag [#allocation6], %s286
        %s288 = sand.u32 %s76, 1
        %s289 = smul.addr %s288, 8
        %s290 = scalar_lea.vmem [#allocation5], %s289
        %p291 = pneg %p89
        %p292 = pneg %p86
        %s293 = sand.u32 %s28, 1
        %s294 = scalar_lea.sflag [#allocation6], %s293
        %s295 = sand.u32 %s102, 1
        %s296 = smul.addr %s295, 8
        %s297 = scalar_lea.vmem [#allocation7], %s296
        %p298 = pneg %p115
        %p299 = pneg %p112
        %p300 = pneg %p143
        %p301 = pneg %p140
        %s302 = sand.u32 %s130, 1
        %s303 = scalar_lea.sflag [#allocation4], %s302
        %s304 = sand.u32 %s130, 1
        %s305 = smul.addr %s304, 8
        %s306 = scalar_lea.vmem [#allocation8], %s305
        %p307 = pneg %p171
        %p308 = pneg %p168
        %s309 = sand.u32 %s158, 1
        %s310 = scalar_lea.sflag [#allocation10], %s309
        %s311 = sand.u32 %s158, 1
        %s312 = smul.addr %s311, 8
        %s313 = scalar_lea.vmem [#allocation9], %s312
        %v314 = vld [vmem:[%s256] sm:$0xff]
        %v315 = vld [vmem:[%s265] sm:$0xff]
        %v316 = vld [vmem:[%s274] sm:$0xff]
        %vm317 = vcmask 130048
        %v319 = vsel %vm317, %v314, 0
        %v322 = vsel %vm317, %v315, 0
        %324 = vmatprep.subr.mxu0 0.0
        %325 = vmatpush1.xpose.msra.mxu0 %v322
        %326 = vmatprep.subr.mxu0 0.0
        %327 = vmatpush1.xpose.msra.mxu0 0.0
        %328 = vmatprep.subr.mxu0 0.0
        %329 = vmatpush1.xpose.msra.mxu0 0.0
        %330 = vmatprep.subr.mxu0 0.0
        %331 = vmatpush1.xpose.msra.mxu0 0.0
        %332 = vmatprep.subr.mxu0 0.0
        %333 = vmatpush1.xpose.msra.mxu0 0.0
        %334 = vmatprep.subr.mxu0 0.0
        %335 = vmatpush1.xpose.msra.mxu0 0.0
        %336 = vmatprep.subr.mxu0 0.0
        %337 = vmatpush1.xpose.msra.mxu0 0.0
        %338 = vmatprep.subr.mxu0 0.0
        %339 = vmatpush1.xpose.msra.mxu0 0.0
        %340 = vmatprep.subr.mxu0 0.0
        %341 = vmatpush1.xpose.msra.mxu0 0.0
        %342 = vmatprep.subr.mxu0 0.0
        %343 = vmatpush1.xpose.msra.mxu0 0.0
        %344 = vmatprep.subr.mxu0 0.0
        %345 = vmatpush1.xpose.msra.mxu0 0.0
        %346 = vmatprep.subr.mxu0 0.0
        %347 = vmatpush1.xpose.msra.mxu0 0.0
        %348 = vmatprep.subr.mxu0 0.0
        %349 = vmatpush1.xpose.msra.mxu0 0.0
        %350 = vmatprep.subr.mxu0 0.0
        %351 = vmatpush1.xpose.msra.mxu0 0.0
        %352 = vmatprep.subr.mxu0 0.0
        %353 = vmatpush1.xpose.msra.mxu0 0.0
        %354 = vmatprep.subr.mxu0 0.0
        %355 = vmatpush1.xpose.msra.mxu0 0.0
        %356 = vmatprep.subr.mxu0 0.0
        %357 = vmatpush1.xpose.msra.mxu0 0.0
        %358 = vmatprep.subr.mxu0 0.0
        %359 = vmatpush1.xpose.msra.mxu0 0.0
        %360 = vmatprep.subr.mxu0 0.0
        %361 = vmatpush1.xpose.msra.mxu0 0.0
        %362 = vmatprep.subr.mxu0 0.0
        %363 = vmatpush1.xpose.msra.mxu0 0.0
        %364 = vmatprep.subr.mxu0 0.0
        %365 = vmatpush1.xpose.msra.mxu0 0.0
        %366 = vmatprep.subr.mxu0 0.0
        %367 = vmatpush1.xpose.msra.mxu0 0.0
        %368 = vmatprep.subr.mxu0 0.0
        %369 = vmatpush1.xpose.msra.mxu0 0.0
        %370 = vmatprep.subr.mxu0 0.0
        %371 = vmatpush1.xpose.msra.mxu0 0.0
        %372 = vmatprep.subr.mxu0 0.0
        %373 = vmatpush1.xpose.msra.mxu0 0.0
        %374 = vmatprep.subr.mxu0 0.0
        %375 = vmatpush1.xpose.msra.mxu0 0.0
        %376 = vmatprep.subr.mxu0 0.0
        %377 = vmatpush1.xpose.msra.mxu0 0.0
        %378 = vmatprep.subr.mxu0 0.0
        %379 = vmatpush1.xpose.msra.mxu0 0.0
        %380 = vmatprep.subr.mxu0 0.0
        %381 = vmatpush1.xpose.msra.mxu0 0.0
        %382 = vmatprep.subr.mxu0 0.0
        %383 = vmatpush1.xpose.msra.mxu0 0.0
        %384 = vmatprep.subr.mxu0 0.0
        %385 = vmatpush1.xpose.msra.mxu0 0.0
        %386 = vmatprep.subr.mxu0 0.0
        %387 = vmatpush1.xpose.msra.mxu0 0.0
        %388 = vmatprep.mubr.f32.mxu0 0.0
        %389 = vmatmul.mubr.f32.gmra.mrb[0].mxu0 %v319
        %v390 = vpop.f32.mrb[0].mxu0
        %v391 = vadd.f32 0.0, %v390
        %v392 = vpop.f32.mrb[0].mxu0
        %393 = vdwg.mxu0
        %vm394 = vcmask 64512
        %v395 = vsel %vm394, %v391, -inf
        %396 = vmax.xlane.f32.xlu0 %v395
        %v397 = vpop.xlane.xlu0 %396
        %v398 = vsub.f32 %v397, 1.0
        loop: start=0, step=1, limit=32
        $region45: #{tpu_custom_call.1} parent=31 // loop_pre_header
          _
        $region46: #{tpu_custom_call.1} parent=31 // loop_header
          %s400 = sphi 0, %s404
          %p401 = scmp.ge.s32.totalorder %s400, 32
          %v405 = vphi %v398, %v415
          %v406 = vphi %v397, %v416
        $region47: #{tpu_custom_call.1} parent=31 // loop_header_branch
          %403 = sbr.rel (%p401) target = $region51
        $region48: #{tpu_custom_call.1} parent=31 // loop_body
          %v407 = vadd.f32 %v405, %v406
          %v408 = vmul.f32 %v407, 0.5
          %v409 = vsub.f32 %v391, %v408
          %v410 = vmax.f32 %v409, 0.0
          %v411 = vsel %vm394, %v410, 0.0
          %412 = vadd.xlane.f32.xlu0 %v411
          %v413 = vpop.xlane.xlu0 %412
          %vm414 = vcmp.gt.f32.partialorder %v413, 1.0
          %v415 = vsel %vm414, %v408, %v405
          %v416 = vsel %vm414, %v406, %v408
        $region49: #{tpu_custom_call.1} parent=31 // loop_footer
          %s404 = sadd.s32 1, %s400
        $region50: #{tpu_custom_call.1} parent=31 // loop_footer_branch
          %399 = sbr.rel target = $region46
        $region51: #{tpu_custom_call.1} parent=31 // loop_exit
          _
        %vm417 = vcmp.gt.f32.partialorder %v391, %v406
        %v418 = vsel %vm417, 1, 0
        %v419 = vcvt.s32.f32 %v418
        %v420 = vsel %vm394, %v419, 0.0
        %421 = vadd.xlane.f32.xlu0 %v420
        %v422 = vpop.xlane.xlu0 %421
        %v423 = vmax.f32 %v422, 1.0
        %v424 = vsel %vm417, %v391, 0.0
        %v425 = vsel %vm394, %v424, 0.0
        %426 = vadd.xlane.f32.xlu0 %v425
        %v427 = vpop.xlane.xlu0 %426
        %v428 = vsub.f32 %v427, 2.0
        %v429 = vrcp.pop %v423
        %v430 = vmul.f32 %v428, %v429
        %v431 = vsub.f32 %v391, %v430
        %v432 = vmax.f32 %v431, 0.0
        %v433 = vsel %vm394, %v432, 0.0
        %434 = vadd.xlane.f32.xlu0 %v433
        %v435 = vpop.xlane.xlu0 %434
        %v436 = vmax.f32 %v435, 1e-12
        %v437 = vrcp.pop %v436
        %v438 = vmul.f32 1.0, %v437
        %v439 = vmul.f32 %v432, %v438
        %v441 = vsel %vm394, %v439, 0
        %443 = vmatprep.subr.mxu0 0.0
        %444 = vmatpush1.msra.mxu0 %v316
        %445 = vmatprep.subr.mxu0 0.0
        %446 = vmatpush1.msra.mxu0 0.0
        %447 = vmatprep.subr.mxu0 0.0
        %448 = vmatpush1.msra.mxu0 0.0
        %449 = vmatprep.subr.mxu0 0.0
        %450 = vmatpush1.msra.mxu0 0.0
        %451 = vmatprep.subr.mxu0 0.0
        %452 = vmatpush1.msra.mxu0 0.0
        %453 = vmatprep.subr.mxu0 0.0
        %454 = vmatpush1.msra.mxu0 0.0
        %455 = vmatprep.subr.mxu0 0.0
        %456 = vmatpush1.msra.mxu0 0.0
        %457 = vmatprep.subr.mxu0 0.0
        %458 = vmatpush1.msra.mxu0 0.0
        %459 = vmatprep.subr.mxu0 0.0
        %460 = vmatpush1.msra.mxu0 0.0
        %461 = vmatprep.subr.mxu0 0.0
        %462 = vmatpush1.msra.mxu0 0.0
        %463 = vmatprep.subr.mxu0 0.0
        %464 = vmatpush1.msra.mxu0 0.0
        %465 = vmatprep.subr.mxu0 0.0
        %466 = vmatpush1.msra.mxu0 0.0
        %467 = vmatprep.subr.mxu0 0.0
        %468 = vmatpush1.msra.mxu0 0.0
        %469 = vmatprep.subr.mxu0 0.0
        %470 = vmatpush1.msra.mxu0 0.0
        %471 = vmatprep.subr.mxu0 0.0
        %472 = vmatpush1.msra.mxu0 0.0
        %473 = vmatprep.subr.mxu0 0.0
        %474 = vmatpush1.msra.mxu0 0.0
        %475 = vmatprep.subr.mxu0 0.0
        %476 = vmatpush1.msra.mxu0 0.0
        %477 = vmatprep.subr.mxu0 0.0
        %478 = vmatpush1.msra.mxu0 0.0
        %479 = vmatprep.subr.mxu0 0.0
        %480 = vmatpush1.msra.mxu0 0.0
        %481 = vmatprep.subr.mxu0 0.0
        %482 = vmatpush1.msra.mxu0 0.0
        %483 = vmatprep.subr.mxu0 0.0
        %484 = vmatpush1.msra.mxu0 0.0
        %485 = vmatprep.subr.mxu0 0.0
        %486 = vmatpush1.msra.mxu0 0.0
        %487 = vmatprep.subr.mxu0 0.0
        %488 = vmatpush1.msra.mxu0 0.0
        %489 = vmatprep.subr.mxu0 0.0
        %490 = vmatpush1.msra.mxu0 0.0
        %491 = vmatprep.subr.mxu0 0.0
        %492 = vmatpush1.msra.mxu0 0.0
        %493 = vmatprep.subr.mxu0 0.0
        %494 = vmatpush1.msra.mxu0 0.0
        %495 = vmatprep.subr.mxu0 0.0
        %496 = vmatpush1.msra.mxu0 0.0
        %497 = vmatprep.subr.mxu0 0.0
        %498 = vmatpush1.msra.mxu0 0.0
        %499 = vmatprep.subr.mxu0 0.0
        %500 = vmatpush1.msra.mxu0 0.0
        %501 = vmatprep.subr.mxu0 0.0
        %502 = vmatpush1.msra.mxu0 0.0
        %503 = vmatprep.subr.mxu0 0.0
        %504 = vmatpush1.msra.mxu0 0.0
        %505 = vmatprep.subr.mxu0 0.0
        %506 = vmatpush1.msra.mxu0 0.0
        %507 = vmatprep.mubr.f32.mxu0 0.0
        %508 = vmatmul.mubr.f32.gmra.mrb[0].mxu0 %v441
        %v509 = vpop.f32.mrb[0].mxu0
        %v510 = vadd.f32 0.0, %v509
        %v511 = vpop.f32.mrb[0].mxu0
        %512 = vdwg.mxu0
        %513 = vst.msk [vmem:[%s306] sm:$0xff] %vm317, %v510
        %514 = vst.msk [vmem:[%s313] sm:$0xff] %vm394, %v439
        %s515 = sand.u32 %s130, 1
        %s516 = scalar_lea.sflag [#allocation4], %s515
        %s517 = sand.u32 %s130, 1
        %s518 = smul.addr %s517, 8
        %s519 = scalar_lea.vmem [#allocation8], %s518
        %s520 = sand.u32 %s158, 1
        %s521 = scalar_lea.sflag [#allocation10], %s520
        %s522 = sand.u32 %s158, 1
        %s523 = smul.addr %s522, 8
        %s524 = scalar_lea.vmem [#allocation9], %s523
        // Predicated region
        $region52: #{tpu_custom_call.1} parent=31 // pred_check
          %p525 = pneg %p140
        $region53: #{tpu_custom_call.1} parent=31 // pred_check_branch
          %527 = sbr.rel (%p525) target = $region55
        $region54: #{tpu_custom_call.1} parent=31 // pred_region
          %s529 = ssub.s32 128, 128
          %530 = vsyncadd %s516, %s529
          %s531 = sadd.s32 %s33, %s32
          %s532 = smul.addr %s531, 128
          %s533 = scalar_lea.hbm %s3, %s532
          %s535 = sshll.u32 %s519, 4
          %s536 = int_to_ptr.vmem [resolvable:$true] %s535
          %538 = dma.vmem_to_hbm [thread:$0]  %s536, 128, %s533, %s516
        $region55: #{tpu_custom_call.1} parent=31 // pred_fallthru
          _
        // Predicated region
        $region56: #{tpu_custom_call.1} parent=31 // pred_check
          %p539 = pneg %p168
        $region57: #{tpu_custom_call.1} parent=31 // pred_check_branch
          %541 = sbr.rel (%p539) target = $region59
        $region58: #{tpu_custom_call.1} parent=31 // pred_region
          %s543 = ssub.s32 128, 128
          %544 = vsyncadd %s521, %s543
          %s545 = sadd.s32 %s33, %s32
          %s546 = smul.addr %s545, 128
          %s547 = scalar_lea.hbm %s4, %s546
          %s549 = sshll.u32 %s524, 4
          %s550 = int_to_ptr.vmem [resolvable:$true] %s549
          %552 = dma.vmem_to_hbm [thread:$0]  %s550, 128, %s547, %s521
        $region59: #{tpu_custom_call.1} parent=31 // pred_fallthru
          _
      $region32: #{tpu_custom_call.1} parent=5 // pred_fallthru
        _
      %p553 = scmp.le.s32.totalorder 2, %s23
      // Predicated region
      $region60: #{tpu_custom_call.1} parent=5 // pred_check
        %p554 = pneg %p553
      $region61: #{tpu_custom_call.1} parent=5 // pred_check_branch
        %556 = sbr.rel (%p554) target = $region63
      $region62: #{tpu_custom_call.1} parent=5 // pred_region
        %s557 = ssub.s32 %s23, 2
        // Predicated region
        $region64: #{tpu_custom_call.1} parent=62 // pred_check
          %p558 = pneg %p146
        $region65: #{tpu_custom_call.1} parent=62 // pred_check_branch
          %560 = sbr.rel (%p558) target = $region67
        $region66: #{tpu_custom_call.1} parent=62 // pred_region
          %s561 = sand.u32 %s131, 1
          %s562 = scalar_lea.sflag [#allocation4], %s561
          %s563 = sand.u32 %s131, 1
          %s564 = smul.addr %s563, 8
          %s565 = scalar_lea.vmem [#allocation8], %s564
          %566 = dma.done %s562, 128
        $region67: #{tpu_custom_call.1} parent=62 // pred_fallthru
          _
        // Predicated region
        $region68: #{tpu_custom_call.1} parent=62 // pred_check
          %p567 = pneg %p174
        $region69: #{tpu_custom_call.1} parent=62 // pred_check_branch
          %569 = sbr.rel (%p567) target = $region71
        $region70: #{tpu_custom_call.1} parent=62 // pred_region
          %s570 = sand.u32 %s159, 1
          %s571 = scalar_lea.sflag [#allocation10], %s570
          %s572 = sand.u32 %s159, 1
          %s573 = smul.addr %s572, 8
          %s574 = scalar_lea.vmem [#allocation9], %s573
          %575 = dma.done %s571, 128
        $region71: #{tpu_custom_call.1} parent=62 // pred_fallthru
          _
      $region63: #{tpu_custom_call.1} parent=5 // pred_fallthru
        _
    $region6: #{tpu_custom_call.1} parent=1 // loop_footer
      %s27 = sadd.s32 1, %s23
    $region7: #{tpu_custom_call.1} parent=1 // loop_footer_branch
      %22 = sbr.rel target = $region3
    $region8: #{tpu_custom_call.1} parent=1 // loop_exit
      _
    %576 = vsyncpa [#allocation3], 1
    %s577 = scalar_lea.sflag [#allocation3], 1
    %578 = vsyncpa %s577, 1
    %579 = vsyncpa [#allocation6], 1
    %s580 = scalar_lea.sflag [#allocation6], 1
    %581 = vsyncpa %s580, 1
    %582 = vsyncpa [#allocation4], 1
    %s583 = scalar_lea.sflag [#allocation4], 1
    %584 = vsyncpa %s583, 1
    %585 = vsyncpa [#allocation10], 1
    %s586 = scalar_lea.sflag [#allocation10], 1
    %587 = vsyncpa %s586, 1

</llo_original>
